<compile_context>
chip_gen: v7x
topology: tpu7x:2x2x1
jax: 0.10.0
libtpu: 0.0.40
codegen_flags: <defaults>
</compile_context>

<pallas_src>
import jax
import jax.numpy as jnp
from jax.experimental import pallas as pl
from jax.experimental.pallas import tpu as pltpu


def _round_up(n: int, m: int) -> int:
    return ((n + m - 1) // m) * m


# ----------------------------- kernels --------------------------------------


def _mlp_kernel(x_ref, w1t_ref, b1_ref, w2t_ref, b2_ref, o_ref):
    """Single-shot fused MLP: both weight matrices VMEM-resident."""
    # fc1: bf16 x bf16 -> f32 accumulation on the MXU.
    h = jnp.dot(x_ref[...], w1t_ref[...], preferred_element_type=jnp.float32)
    # bias + ReLU on the f32 accumulator (VPU), then back to the MXU dtype.
    h = jnp.maximum(h + b1_ref[...], 0.0).astype(w2t_ref.dtype)
    # out: lane-dense second matmul + bias, single downcast at the store.
    y = jnp.dot(h, w2t_ref[...], preferred_element_type=jnp.float32)
    o_ref[...] = (y + b2_ref[...]).astype(o_ref.dtype)


def _mlp_hidden_tiled_kernel(x_ref, w1t_ref, b1_ref, w2t_ref, b2_ref, o_ref,
                             acc_ref):
    """Hidden-dim tiled path: y = sum_h relu(x @ W1t[:,h] + b1[h]) @ W2t[h,:]."""
    hi = pl.program_id(1)

    @pl.when(hi == 0)
    def _():
        acc_ref[...] = jnp.zeros_like(acc_ref)

    h = jnp.dot(x_ref[...], w1t_ref[...], preferred_element_type=jnp.float32)
    h = jnp.maximum(h + b1_ref[...], 0.0).astype(w2t_ref.dtype)
    acc_ref[...] += jnp.dot(h, w2t_ref[...], preferred_element_type=jnp.float32)

    @pl.when(hi == pl.num_programs(1) - 1)
    def _():
        o_ref[...] = (acc_ref[...] + b2_ref[...]).astype(o_ref.dtype)


# ----------------------------- wrappers --------------------------------------


def prepare_nn_params(w1, b1, w2, b2, *, compute_dtype=jnp.bfloat16):
    """One-time layout work (transpose + zero-pad + cast). Call at init time,
    NOT per forward step.

    w1: (hidden, input), b1: (hidden,)   -- PyTorch nn.Linear layout
    w2: (output, hidden), b2: (output,)
    """
    hidden, in_size = w1.shape
    out_size = w2.shape[0]
    in_p = _round_up(in_size, 128)
    hid_p = _round_up(hidden, 128)
    out_p = _round_up(out_size, 128)

    w1t = jnp.zeros((in_p, hid_p), compute_dtype).at[:in_size, :hidden].set(
        w1.T.astype(compute_dtype))
    b1p = jnp.zeros((1, hid_p), jnp.float32).at[0, :hidden].set(
        b1.astype(jnp.float32))
    w2t = jnp.zeros((hid_p, out_p), compute_dtype).at[:hidden, :out_size].set(
        w2.T.astype(compute_dtype))
    b2p = jnp.zeros((1, out_p), jnp.float32).at[0, :out_size].set(
        b2.astype(jnp.float32))

    dims = dict(in_size=in_size, hidden=hidden, out_size=out_size,
                in_p=in_p, hid_p=hid_p, out_p=out_p)
    return (w1t, b1p, w2t, b2p), dims


def nn_forward_prepared(x, params, dims, *, compute_dtype=jnp.bfloat16,
                        batch_tile=256,
                        weight_vmem_budget=24 * 1024 * 1024):
    """Fused forward pass using pre-transposed / pre-padded parameters."""
    w1t, b1p, w2t, b2p = params
    batch, in_size = x.shape
    assert in_size == dims["in_size"]
    in_p, hid_p, out_p = dims["in_p"], dims["hid_p"], dims["out_p"]
    out_size = dims["out_size"]
    out_dtype = x.dtype

    wbytes = jnp.dtype(compute_dtype).itemsize
    out_bytes = jnp.dtype(out_dtype).itemsize
    # Sublane packing quantum: 8 rows * (32 bits / element bits).
    sub = max(8, (8 * 4) // wbytes)

    batch_p = _round_up(batch, sub)
    if batch_p <= batch_tile:
        # Whole batch fits one tile. Split in two when possible so both v7x
        # TensorCores get a "parallel" tile; otherwise single tile.
        if batch_p >= 2 * sub and (batch_p // 2) % sub == 0:
            tile_b = batch_p // 2
        else:
            tile_b = batch_p
    else:
        tile_b = batch_tile
        batch_p = _round_up(batch, tile_b)

    # x: skip the pad/cast HBM round-trip when already aligned.
    if batch_p == batch and in_p == in_size and x.dtype == jnp.dtype(compute_dtype):
        xp = x
    else:
        xp = jnp.zeros((batch_p, in_p), compute_dtype).at[:batch, :in_size].set(
            x.astype(compute_dtype))

    weight_bytes = (in_p * hid_p + hid_p * out_p) * wbytes
    flops = 2 * batch_p * (in_p * hid_p + hid_p * out_p)
    io_bytes = (batch_p * in_p * wbytes + weight_bytes
                + (hid_p + out_p) * 4 + batch_p * out_p * out_bytes)
    cost = pl.CostEstimate(flops=flops, transcendentals=0,
                           bytes_accessed=io_bytes)

    single = pl.Buffered(1)   # constant-index operands: no second buffer

    if weight_bytes <= weight_vmem_budget:
        # ------------------- single-shot path (weights resident) -------------
        grid = (batch_p // tile_b,)
        vmem_needed = (weight_bytes                         # weights, 1-buffered
                       + (hid_p + out_p) * 4                # biases (f32)
                       + 2 * tile_b * in_p * wbytes         # x tile x2
                       + 2 * tile_b * out_p * out_bytes     # out tile x2
                       + tile_b * hid_p * 4)                # f32 hidden interm.
        vmem_limit = int(min(max(vmem_needed * 1.5, 32 * 1024 * 1024),
                             64 * 1024 * 1024))

        out_padded = pl.pallas_call(
            _mlp_kernel,
            out_shape=jax.ShapeDtypeStruct((batch_p, out_p), out_dtype),
            grid=grid,
            in_specs=[
                pl.BlockSpec((tile_b, in_p), lambda i: (i, 0)),
                pl.BlockSpec((in_p, hid_p), lambda i: (0, 0), pipeline_mode=single),
                pl.BlockSpec((1, hid_p), lambda i: (0, 0), pipeline_mode=single),
                pl.BlockSpec((hid_p, out_p), lambda i: (0, 0), pipeline_mode=single),
                pl.BlockSpec((1, out_p), lambda i: (0, 0), pipeline_mode=single),
            ],
            out_specs=pl.BlockSpec((tile_b, out_p), lambda i: (i, 0)),
            compiler_params=pltpu.CompilerParams(
                dimension_semantics=("parallel",),
                vmem_limit_bytes=vmem_limit),
            cost_estimate=cost,
        )(xp, w1t, b1p, w2t, b2p)
    else:
        # ------------------- hidden-tiled path (large models) ----------------
        def per_h_bytes(th):
            return (in_p * th + th * out_p) * wbytes

        tile_h = 128
        cand = hid_p
        while cand >= 128:
            if hid_p % cand == 0 and 2 * per_h_bytes(cand) <= weight_vmem_budget:
                tile_h = cand
                break
            cand -= 128

        grid = (batch_p // tile_b, hid_p // tile_h)
        vmem_needed = (2 * per_h_bytes(tile_h)              # weight tiles x2
                       + 2 * tile_h * 4 + out_p * 4         # biases
                       + 2 * tile_b * in_p * wbytes         # x tile x2
                       + 2 * tile_b * out_p * out_bytes     # out tile x2
                       + tile_b * out_p * 4                 # f32 accumulator
                       + tile_b * tile_h * 4)               # f32 hidden interm.
        vmem_limit = int(min(max(vmem_needed * 1.5, 32 * 1024 * 1024),
                             64 * 1024 * 1024))

        out_padded = pl.pallas_call(
            _mlp_hidden_tiled_kernel,
            out_shape=jax.ShapeDtypeStruct((batch_p, out_p), out_dtype),
            grid=grid,
            in_specs=[
                pl.BlockSpec((tile_b, in_p), lambda i, h: (i, 0)),
                pl.BlockSpec((in_p, tile_h), lambda i, h: (0, h)),
                pl.BlockSpec((1, tile_h), lambda i, h: (0, h)),
                pl.BlockSpec((tile_h, out_p), lambda i, h: (h, 0)),
                pl.BlockSpec((1, out_p), lambda i, h: (0, 0), pipeline_mode=single),
            ],
            out_specs=pl.BlockSpec((tile_b, out_p), lambda i, h: (i, 0)),
            scratch_shapes=[pltpu.VMEM((tile_b, out_p), jnp.float32)],
            compiler_params=pltpu.CompilerParams(
                dimension_semantics=("parallel", "arbitrary"),
                vmem_limit_bytes=vmem_limit),
            cost_estimate=cost,
        )(xp, w1t, b1p, w2t, b2p)

    # Strip padding outside the kernel (keeps the in-kernel store lane-dense).
    return out_padded[:batch, :out_size]


def nn_forward(x, w1, b1, w2, b2, *, compute_dtype=jnp.bfloat16, batch_tile=256):
    """Convenience wrapper matching NN.forward(x). For training/serving loops,
    call prepare_nn_params once and nn_forward_prepared per step."""
    params, dims = prepare_nn_params(w1, b1, w2, b2, compute_dtype=compute_dtype)
    return nn_forward_prepared(x, params, dims, compute_dtype=compute_dtype,
                               batch_tile=batch_tile)


# ----------------------------- demo / check ----------------------------------


def init_linear_params(key, in_features, out_features, dtype=jnp.float32):
    """Mimics torch.nn.Linear default init: U[-1/sqrt(fan_in), +1/sqrt(fan_in)]."""
    kw, kb = jax.random.split(key)
    bound = 1.0 / jnp.sqrt(jnp.array(in_features, dtype=dtype))
    w = jax.random.uniform(kw, (out_features, in_features), dtype,
                           minval=-bound, maxval=bound)
    b = jax.random.uniform(kb, (out_features,), dtype,
                           minval=-bound, maxval=bound)
    return w, b


def reference_forward(x, w1, b1, w2, b2):
    h = jnp.maximum(x @ w1.T + b1, 0.0)
    return h @ w2.T + b2


if __name__ == "__main__":
    # Small shapes consistent with NN(input_size, hidden_size, output_size).
    batch = 8
    input_size = 256
    hidden_size = 128
    output_size = 10

    key = jax.random.PRNGKey(0)
    kx, k1, k2 = jax.random.split(key, 3)

    x = jax.random.normal(kx, (batch, input_size), jnp.float32)
    w1, b1 = init_linear_params(k1, input_size, hidden_size)
    w2, b2 = init_linear_params(k2, hidden_size, output_size)

    ref = reference_forward(x, w1, b1, w2, b2)

    # Default fast path: bf16 on the MXU with f32 accumulation.
    out_bf16 = jax.block_until_ready(
        nn_forward(x, w1, b1, w2, b2, compute_dtype=jnp.bfloat16))
    assert out_bf16.shape == (batch, output_size)
    assert jnp.allclose(out_bf16, ref, atol=1e-1, rtol=1e-1), \
        "bf16 kernel mismatch vs f32 reference"

    # Exactness check of the kernel structure: f32 compute path.
    out_f32 = jax.block_until_ready(
        nn_forward(x, w1, b1, w2, b2, compute_dtype=jnp.float32))
    assert out_f32.shape == (batch, output_size)
    assert jnp.allclose(out_f32, ref, atol=1e-4, rtol=1e-4), \
        "f32 kernel mismatch vs reference"

    print("KERNEL_OK")
</pallas_src>

<mosaic_0001>
module attributes {stable_mosaic.version = 11 : i64} {
  func.func @_mlp_kernel(%arg0: i32, %arg1: memref<16x256xbf16, #tpu.memory_space<vmem>>, %arg2: memref<256x128xbf16, #tpu.memory_space<vmem>>, %arg3: memref<1x128xf32, #tpu.memory_space<vmem>>, %arg4: memref<128x128xbf16, #tpu.memory_space<vmem>>, %arg5: memref<1x128xf32, #tpu.memory_space<vmem>>, %arg6: memref<16x128xf32, #tpu.memory_space<vmem>>) attributes {dimension_semantics = [#tpu.dimension_semantics<parallel>], iteration_bounds = array<i64: 1>, scalar_prefetch = 0 : i64, scratch_operands = 0 : i64, tpu.core_type = #tpu.core_type<tc>, window_params = [{transform_indices = @transform_0, window_bounds = array<i64: 16, 256>}, {pipeline_mode = #tpu.pipeline_mode<synchronous>, transform_indices = @transform_1, window_bounds = array<i64: 256, 128>}, {pipeline_mode = #tpu.pipeline_mode<synchronous>, transform_indices = @transform_2, window_bounds = array<i64: 1, 128>}, {pipeline_mode = #tpu.pipeline_mode<synchronous>, transform_indices = @transform_3, window_bounds = array<i64: 128, 128>}, {pipeline_mode = #tpu.pipeline_mode<synchronous>, transform_indices = @transform_4, window_bounds = array<i64: 1, 128>}, {transform_indices = @transform_5, window_bounds = array<i64: 16, 128>}]} {
    %c0 = arith.constant 0 : index
    %c0_0 = arith.constant 0 : index
    %0 = vector.load %arg1[%c0, %c0_0] : memref<16x256xbf16, #tpu.memory_space<vmem>>, vector<16x256xbf16>
    %c0_1 = arith.constant 0 : index
    %c0_2 = arith.constant 0 : index
    %1 = vector.load %arg2[%c0_1, %c0_2] : memref<256x128xbf16, #tpu.memory_space<vmem>>, vector<256x128xbf16>
    %cst = arith.constant dense<0.000000e+00> : vector<16x128xf32>
    %2 = tpu.matmul %0, %1, %cst {dimension_numbers = #tpu.dot_dimension_numbers<[1], [0], [0], [1], [0, 0, 1, 1], [], []>} : vector<16x256xbf16>, vector<256x128xbf16>, vector<16x128xf32> -> vector<16x128xf32>
    %c0_3 = arith.constant 0 : index
    %c0_4 = arith.constant 0 : index
    %3 = vector.load %arg3[%c0_3, %c0_4] : memref<1x128xf32, #tpu.memory_space<vmem>>, vector<1x128xf32>
    %4 = vector.broadcast %3 : vector<1x128xf32> to vector<16x128xf32>
    %5 = arith.addf %2, %4 : vector<16x128xf32>
    %cst_5 = arith.constant 0.000000e+00 : f32
    %6 = vector.broadcast %cst_5 : f32 to vector<16x128xf32>
    %7 = arith.maximumf %5, %6 : vector<16x128xf32>
    %8 = arith.truncf %7 : vector<16x128xf32> to vector<16x128xbf16>
    %c0_6 = arith.constant 0 : index
    %c0_7 = arith.constant 0 : index
    %9 = vector.load %arg4[%c0_6, %c0_7] : memref<128x128xbf16, #tpu.memory_space<vmem>>, vector<128x128xbf16>
    %cst_8 = arith.constant dense<0.000000e+00> : vector<16x128xf32>
    %10 = tpu.matmul %8, %9, %cst_8 {dimension_numbers = #tpu.dot_dimension_numbers<[1], [0], [0], [1], [0, 0, 1, 1], [], []>} : vector<16x128xbf16>, vector<128x128xbf16>, vector<16x128xf32> -> vector<16x128xf32>
    %c0_9 = arith.constant 0 : index
    %c0_10 = arith.constant 0 : index
    %11 = vector.load %arg5[%c0_9, %c0_10] : memref<1x128xf32, #tpu.memory_space<vmem>>, vector<1x128xf32>
    %12 = vector.broadcast %11 : vector<1x128xf32> to vector<16x128xf32>
    %13 = arith.addf %10, %12 : vector<16x128xf32>
    %c0_11 = arith.constant 0 : index
    %c0_12 = arith.constant 0 : index
    %14 = vector.load %arg6[%c0_11, %c0_12] : memref<16x128xf32, #tpu.memory_space<vmem>>, vector<16x128xf32>
    tpu.vector_store %arg6[%c0_11, %c0_12], %13 {strides = array<i32>} : memref<16x128xf32, #tpu.memory_space<vmem>>, vector<16x128xf32>,
    return
  }
  func.func @transform_0(%arg0: i32) -> (i32, i32) {
    %c0_i32 = arith.constant 0 : i32
    %c0_i32_0 = arith.constant 0 : i32
    return %arg0, %c0_i32 : i32, i32
  }
  func.func @transform_1(%arg0: i32) -> (i32, i32) {
    %c0_i32 = arith.constant 0 : i32
    %c0_i32_0 = arith.constant 0 : i32
    %c0_i32_1 = arith.constant 0 : i32
    return %c0_i32, %c0_i32_0 : i32, i32
  }
  func.func @transform_2(%arg0: i32) -> (i32, i32) {
    %c0_i32 = arith.constant 0 : i32
    %c0_i32_0 = arith.constant 0 : i32
    %c0_i32_1 = arith.constant 0 : i32
    return %c0_i32, %c0_i32_0 : i32, i32
  }
  func.func @transform_3(%arg0: i32) -> (i32, i32) {
    %c0_i32 = arith.constant 0 : i32
    %c0_i32_0 = arith.constant 0 : i32
    %c0_i32_1 = arith.constant 0 : i32
    return %c0_i32, %c0_i32_0 : i32, i32
  }
  func.func @transform_4(%arg0: i32) -> (i32, i32) {
    %c0_i32 = arith.constant 0 : i32
    %c0_i32_0 = arith.constant 0 : i32
    %c0_i32_1 = arith.constant 0 : i32
    return %c0_i32, %c0_i32_0 : i32, i32
  }
  func.func @transform_5(%arg0: i32) -> (i32, i32) {
    %c0_i32 = arith.constant 0 : i32
    %c0_i32_0 = arith.constant 0 : i32
    return %arg0, %c0_i32 : i32, i32
  }
}

</mosaic_0001>

<llo_original>
// kernel: tpu_custom_call.1
$region0: #{tpu_custom_call.1}
  #allocation0 [shape = 'u32[]', space=smem, size = 0x4, offset = 0x4, fixed_abs, tag = 'smem constant byte address 0x4 - core index']
  #allocation1 [shape = 'u32[144,128]{1,0:T(1,128)}', space=vmem, size = 0x12000, scoped, tag = 'internal scratch']
  %s0 = inlined_call_operand.hbm [shape: bf16[16,256], index: 0, kind: input, shape index: {}]
  %s1 = inlined_call_operand.hbm [shape: bf16[256,128], index: 1, kind: input, shape index: {}]
  %s2 = inlined_call_operand.vmem [shape: f32[1,128], index: 2, kind: input, shape index: {}]
  %s3 = inlined_call_operand.hbm [shape: bf16[128,128], index: 3, kind: input, shape index: {}]
  %s4 = inlined_call_operand.vmem [shape: f32[1,128], index: 4, kind: input, shape index: {}]
  %s5 = inlined_call_operand.hbm [shape: f32[16,128], index: 5, kind: output, shape index: {}]
  %s6 = sld [smem:[#allocation0]]
  $region42: #{tpu_custom_call.1} parent=0
    _
  %s8 = ssub.s32 1, %s6
  %s9 = scalar_select 0, %s8, %s6
  $region1: #{tpu_custom_call.1} parent=0
    #allocation2 [shape = 'u8[8192]{0}', space=vmem, size = 0x2000, scoped, tag = 'input window, operand 0, single buffered']
    #allocation3 [shape = 's32[1]{0}', space=sflag, size = 0x4, scoped, tag = 'scoped memory for tpu_custom_call.1']
    #allocation4 [shape = 's32[1]{0}', space=sflag, size = 0x4, scoped, tag = 'scoped memory for tpu_custom_call.1']
    #allocation5 [shape = 'u8[65536]{0}', space=vmem, size = 0x10000, scoped, tag = 'input window, operand 1, single buffered']
    #allocation6 [shape = 's32[1]{0}', space=sflag, size = 0x4, scoped, tag = 'scoped memory for tpu_custom_call.1']
    #allocation7 [shape = 'u8[32768]{0}', space=vmem, size = 0x8000, scoped, tag = 'input window, operand 3, single buffered']
    #allocation8 [shape = 'u8[8192]{0}', space=vmem, size = 0x2000, scoped, tag = 'output window, operand 0, single buffered']
    %10 = vsyncpa [#allocation3], 0
    %11 = vsyncpa [#allocation6], 0
    %12 = vsyncpa [#allocation4], 0
    // Predicated region
    $region2: #{tpu_custom_call.1} parent=1 // pred_check
      _
    $region3: #{tpu_custom_call.1} parent=1 // pred_check_branch
      %14 = sbr.rel (0) target = $region5
    $region4: #{tpu_custom_call.1} parent=1 // pred_region
      %s16 = ssub.s32 256, 256
      %17 = vsyncadd [#allocation3], %s16
      %s18 = sshll.u32 [#allocation2], 4
      %s19 = int_to_ptr.vmem [resolvable:$true] %s18
      %24 = dma.hbm_to_vmem [thread:$0]  %s0, 256, %s19, [#allocation3], 128, 128, 8
    $region5: #{tpu_custom_call.1} parent=1 // pred_fallthru
      _
    // Predicated region
    $region6: #{tpu_custom_call.1} parent=1 // pred_check
      _
    $region7: #{tpu_custom_call.1} parent=1 // pred_check_branch
      %26 = sbr.rel (0) target = $region9
    $region8: #{tpu_custom_call.1} parent=1 // pred_region
      %s28 = ssub.s32 2048, 2048
      %29 = vsyncadd [#allocation6], %s28
      %s30 = sshll.u32 [#allocation5], 4
      %s31 = int_to_ptr.vmem [resolvable:$true] %s30
      %36 = dma.hbm_to_vmem [thread:$0]  %s1, 2048, %s31, [#allocation6], 64, 64, 4
    $region9: #{tpu_custom_call.1} parent=1 // pred_fallthru
      _
    // Predicated region
    $region10: #{tpu_custom_call.1} parent=1 // pred_check
      _
    $region11: #{tpu_custom_call.1} parent=1 // pred_check_branch
      %38 = sbr.rel (0) target = $region13
    $region12: #{tpu_custom_call.1} parent=1 // pred_region
      _
    $region13: #{tpu_custom_call.1} parent=1 // pred_fallthru
      _
    // Predicated region
    $region14: #{tpu_custom_call.1} parent=1 // pred_check
      _
    $region15: #{tpu_custom_call.1} parent=1 // pred_check_branch
      %40 = sbr.rel (0) target = $region17
    $region16: #{tpu_custom_call.1} parent=1 // pred_region
      %s42 = ssub.s32 1024, 1024
      %43 = vsyncadd [#allocation6], %s42
      %s44 = sshll.u32 [#allocation7], 4
      %s45 = int_to_ptr.vmem [resolvable:$true] %s44
      %50 = dma.hbm_to_vmem [thread:$0]  %s3, 1024, %s45, [#allocation6], 64, 64, 4
    $region17: #{tpu_custom_call.1} parent=1 // pred_fallthru
      _
    // Predicated region
    $region18: #{tpu_custom_call.1} parent=1 // pred_check
      _
    $region19: #{tpu_custom_call.1} parent=1 // pred_check_branch
      %52 = sbr.rel (0) target = $region21
    $region20: #{tpu_custom_call.1} parent=1 // pred_region
      _
    $region21: #{tpu_custom_call.1} parent=1 // pred_fallthru
      _
    // Predicated region
    $region22: #{tpu_custom_call.1} parent=1 // pred_check
      _
    $region23: #{tpu_custom_call.1} parent=1 // pred_check_branch
      %54 = sbr.rel (0) target = $region25
    $region24: #{tpu_custom_call.1} parent=1 // pred_region
      %55 = dma.done [#allocation3], 256
    $region25: #{tpu_custom_call.1} parent=1 // pred_fallthru
      _
    // Predicated region
    $region26: #{tpu_custom_call.1} parent=1 // pred_check
      _
    $region27: #{tpu_custom_call.1} parent=1 // pred_check_branch
      %57 = sbr.rel (0) target = $region29
    $region28: #{tpu_custom_call.1} parent=1 // pred_region
      %58 = dma.done [#allocation6], 2048
    $region29: #{tpu_custom_call.1} parent=1 // pred_fallthru
      _
    // Predicated region
    $region30: #{tpu_custom_call.1} parent=1 // pred_check
      _
    $region31: #{tpu_custom_call.1} parent=1 // pred_check_branch
      %60 = sbr.rel (0) target = $region33
    $region32: #{tpu_custom_call.1} parent=1 // pred_region
      %61 = dma.done [#allocation6], 1024
    $region33: #{tpu_custom_call.1} parent=1 // pred_fallthru
      _
    %v63 = vld [vmem:[#allocation2] sm:$0xff]
    %v64 = vld [vmem:[#allocation2 + $0x8] sm:$0xff]
    %v65 = vld [vmem:[#allocation5] sm:$0xf]
    %v66 = vld [vmem:[#allocation5 + $0x4] sm:$0xf]
    %v67 = vld [vmem:[#allocation5 + $0x8] sm:$0xf]
    %v68 = vld [vmem:[#allocation5 + $0xc] sm:$0xf]
    %v69 = vld [vmem:[#allocation5 + $0x10] sm:$0xf]
    %v70 = vld [vmem:[#allocation5 + $0x14] sm:$0xf]
    %v71 = vld [vmem:[#allocation5 + $0x18] sm:$0xf]
    %v72 = vld [vmem:[#allocation5 + $0x1c] sm:$0xf]
    %v73 = vld [vmem:[#allocation5 + $0x20] sm:$0xf]
    %v74 = vld [vmem:[#allocation5 + $0x24] sm:$0xf]
    %v75 = vld [vmem:[#allocation5 + $0x28] sm:$0xf]
    %v76 = vld [vmem:[#allocation5 + $0x2c] sm:$0xf]
    %v77 = vld [vmem:[#allocation5 + $0x30] sm:$0xf]
    %v78 = vld [vmem:[#allocation5 + $0x34] sm:$0xf]
    %v79 = vld [vmem:[#allocation5 + $0x38] sm:$0xf]
    %v80 = vld [vmem:[#allocation5 + $0x3c] sm:$0xf]
    %v81 = vld [vmem:[#allocation5 + $0x40] sm:$0xf]
    %v82 = vld [vmem:[#allocation5 + $0x44] sm:$0xf]
    %v83 = vld [vmem:[#allocation5 + $0x48] sm:$0xf]
    %v84 = vld [vmem:[#allocation5 + $0x4c] sm:$0xf]
    %v85 = vld [vmem:[#allocation5 + $0x50] sm:$0xf]
    %v86 = vld [vmem:[#allocation5 + $0x54] sm:$0xf]
    %v87 = vld [vmem:[#allocation5 + $0x58] sm:$0xf]
    %v88 = vld [vmem:[#allocation5 + $0x5c] sm:$0xf]
    %v89 = vld [vmem:[#allocation5 + $0x60] sm:$0xf]
    %v90 = vld [vmem:[#allocation5 + $0x64] sm:$0xf]
    %v91 = vld [vmem:[#allocation5 + $0x68] sm:$0xf]
    %v92 = vld [vmem:[#allocation5 + $0x6c] sm:$0xf]
    %v93 = vld [vmem:[#allocation5 + $0x70] sm:$0xf]
    %v94 = vld [vmem:[#allocation5 + $0x74] sm:$0xf]
    %v95 = vld [vmem:[#allocation5 + $0x78] sm:$0xf]
    %v96 = vld [vmem:[#allocation5 + $0x7c] sm:$0xf]
    %v97 = vld [vmem:[%s2] sm:$0x1]
    %v99 = vlaneseq
    %v100 = vshrl.u32 %v99, 7
    %v101 = vsub.s32 0, %v100
    %v102 = vrot.slane %v97, %v101
    %v106 = vunpack.c.l.b16 %v63
    %v107 = vunpack.c.h.b16 %v63
    %v108 = vunpack.c.l.b16 %v64
    %v109 = vunpack.c.h.b16 %v64
    %v110 = vpack.c.b16 %v108, %v106
    %v111 = vpack.c.b16 %v109, %v107
    %v146 = vunpack.c.l.b16 %v65
    %v147 = vunpack.c.l.b16 %v66
    %v148 = vunpack.c.l.b16 %v67
    %v149 = vunpack.c.l.b16 %v68
    %v150 = vunpack.c.l.b16 %v69
    %v151 = vunpack.c.l.b16 %v70
    %v152 = vunpack.c.l.b16 %v71
    %v153 = vunpack.c.l.b16 %v72
    %v154 = vunpack.c.l.b16 %v73
    %v155 = vunpack.c.l.b16 %v74
    %v156 = vunpack.c.l.b16 %v75
    %v157 = vunpack.c.l.b16 %v76
    %v158 = vunpack.c.l.b16 %v77
    %v159 = vunpack.c.l.b16 %v78
    %v160 = vunpack.c.l.b16 %v79
    %v161 = vunpack.c.l.b16 %v80
    %v162 = vunpack.c.l.b16 %v81
    %v163 = vunpack.c.l.b16 %v82
    %v164 = vunpack.c.l.b16 %v83
    %v165 = vunpack.c.l.b16 %v84
    %v166 = vunpack.c.l.b16 %v85
    %v167 = vunpack.c.l.b16 %v86
    %v168 = vunpack.c.l.b16 %v87
    %v169 = vunpack.c.l.b16 %v88
    %v170 = vunpack.c.l.b16 %v89
    %v171 = vunpack.c.l.b16 %v90
    %v172 = vunpack.c.l.b16 %v91
    %v173 = vunpack.c.l.b16 %v92
    %v174 = vunpack.c.l.b16 %v93
    %v175 = vunpack.c.l.b16 %v94
    %v176 = vunpack.c.l.b16 %v95
    %v177 = vunpack.c.l.b16 %v96
    %v178 = vpack.c.b16 %v147, %v146
    %v179 = vpack.c.b16 %v149, %v148
    %v180 = vpack.c.b16 %v151, %v150
    %v181 = vpack.c.b16 %v153, %v152
    %v182 = vpack.c.b16 %v155, %v154
    %v183 = vpack.c.b16 %v157, %v156
    %v184 = vpack.c.b16 %v159, %v158
    %v185 = vpack.c.b16 %v161, %v160
    %v186 = vpack.c.b16 %v163, %v162
    %v187 = vpack.c.b16 %v165, %v164
    %v188 = vpack.c.b16 %v167, %v166
    %v189 = vpack.c.b16 %v169, %v168
    %v190 = vpack.c.b16 %v171, %v170
    %v191 = vpack.c.b16 %v173, %v172
    %v192 = vpack.c.b16 %v175, %v174
    %v193 = vpack.c.b16 %v177, %v176
    %210 = vmatprep.subr.bf16.mxu0 0
    %211 = vmatpush1.bf16.msra.mxu0 %v178
    %212 = vmatprep.subr.bf16.mxu0 0
    %213 = vmatpush1.bf16.msra.mxu0 %v179
    %214 = vmatprep.subr.bf16.mxu0 0
    %215 = vmatpush1.bf16.msra.mxu0 %v180
    %216 = vmatprep.subr.bf16.mxu0 0
    %217 = vmatpush1.bf16.msra.mxu0 %v181
    %218 = vmatprep.subr.bf16.mxu0 0
    %219 = vmatpush1.bf16.msra.mxu0 %v182
    %220 = vmatprep.subr.bf16.mxu0 0
    %221 = vmatpush1.bf16.msra.mxu0 %v183
    %222 = vmatprep.subr.bf16.mxu0 0
    %223 = vmatpush1.bf16.msra.mxu0 %v184
    %224 = vmatprep.subr.bf16.mxu0 0
    %225 = vmatpush1.bf16.msra.mxu0 %v185
    %226 = vmatprep.subr.bf16.mxu0 0
    %227 = vmatpush1.bf16.msra.mxu0 %v186
    %228 = vmatprep.subr.bf16.mxu0 0
    %229 = vmatpush1.bf16.msra.mxu0 %v187
    %230 = vmatprep.subr.bf16.mxu0 0
    %231 = vmatpush1.bf16.msra.mxu0 %v188
    %232 = vmatprep.subr.bf16.mxu0 0
    %233 = vmatpush1.bf16.msra.mxu0 %v189
    %234 = vmatprep.subr.bf16.mxu0 0
    %235 = vmatpush1.bf16.msra.mxu0 %v190
    %236 = vmatprep.subr.bf16.mxu0 0
    %237 = vmatpush1.bf16.msra.mxu0 %v191
    %238 = vmatprep.subr.bf16.mxu0 0
    %239 = vmatpush1.bf16.msra.mxu0 %v192
    %240 = vmatprep.subr.bf16.mxu0 0
    %241 = vmatpush1.bf16.msra.mxu0 %v193
    %242 = vmatprep.mubr.bf16.mxu0 %v111
    %243 = vmatmul.mubr.bf16.gmra.mrb[0].mxu0 %v110
    %v244 = vpop.f32.mrb[0].mxu0
    %v245 = vadd.f32 %v102, %v244
    %v246 = vpop.f32.mrb[0].mxu0
    %v247 = vpop.f32.mrb[0].mxu0
    %v248 = vadd.f32 %v102, %v247
    %v249 = vpop.f32.mrb[0].mxu0
    %250 = vdwg.mxu0
    %v251 = vmax.f32 %v245, 0.0
    %v252 = vmax.f32 %v248, 0.0
    %v253 = vpack.c.bf16 %v252, %v251
    %v254 = vld [vmem:[#allocation7] sm:$0xf]
    %v255 = vld [vmem:[#allocation7 + $0x4] sm:$0xf]
    %v256 = vld [vmem:[#allocation7 + $0x8] sm:$0xf]
    %v257 = vld [vmem:[#allocation7 + $0xc] sm:$0xf]
    %v258 = vld [vmem:[#allocation7 + $0x10] sm:$0xf]
    %v259 = vld [vmem:[#allocation7 + $0x14] sm:$0xf]
    %v260 = vld [vmem:[#allocation7 + $0x18] sm:$0xf]
    %v261 = vld [vmem:[#allocation7 + $0x1c] sm:$0xf]
    %v262 = vld [vmem:[#allocation7 + $0x20] sm:$0xf]
    %v263 = vld [vmem:[#allocation7 + $0x24] sm:$0xf]
    %v264 = vld [vmem:[#allocation7 + $0x28] sm:$0xf]
    %v265 = vld [vmem:[#allocation7 + $0x2c] sm:$0xf]
    %v266 = vld [vmem:[#allocation7 + $0x30] sm:$0xf]
    %v267 = vld [vmem:[#allocation7 + $0x34] sm:$0xf]
    %v268 = vld [vmem:[#allocation7 + $0x38] sm:$0xf]
    %v269 = vld [vmem:[#allocation7 + $0x3c] sm:$0xf]
    %v270 = vld [vmem:[%s4] sm:$0x1]
    %v272 = vlaneseq
    %v273 = vshrl.u32 %v272, 7
    %v274 = vsub.s32 0, %v273
    %v275 = vrot.slane %v270, %v274
    %v293 = vunpack.c.l.b16 %v254
    %v294 = vunpack.c.l.b16 %v255
    %v295 = vunpack.c.l.b16 %v256
    %v296 = vunpack.c.l.b16 %v257
    %v297 = vunpack.c.l.b16 %v258
    %v298 = vunpack.c.l.b16 %v259
    %v299 = vunpack.c.l.b16 %v260
    %v300 = vunpack.c.l.b16 %v261
    %v301 = vunpack.c.l.b16 %v262
    %v302 = vunpack.c.l.b16 %v263
    %v303 = vunpack.c.l.b16 %v264
    %v304 = vunpack.c.l.b16 %v265
    %v305 = vunpack.c.l.b16 %v266
    %v306 = vunpack.c.l.b16 %v267
    %v307 = vunpack.c.l.b16 %v268
    %v308 = vunpack.c.l.b16 %v269
    %v309 = vpack.c.b16 %v294, %v293
    %v310 = vpack.c.b16 %v296, %v295
    %v311 = vpack.c.b16 %v298, %v297
    %v312 = vpack.c.b16 %v300, %v299
    %v313 = vpack.c.b16 %v302, %v301
    %v314 = vpack.c.b16 %v304, %v303
    %v315 = vpack.c.b16 %v306, %v305
    %v316 = vpack.c.b16 %v308, %v307
    %325 = vmatprep.subr.bf16.mxu0 0
    %326 = vmatpush1.bf16.msra.mxu0 %v309
    %327 = vmatprep.subr.bf16.mxu0 0
    %328 = vmatpush1.bf16.msra.mxu0 %v310
    %329 = vmatprep.subr.bf16.mxu0 0
    %330 = vmatpush1.bf16.msra.mxu0 %v311
    %331 = vmatprep.subr.bf16.mxu0 0
    %332 = vmatpush1.bf16.msra.mxu0 %v312
    %333 = vmatprep.subr.bf16.mxu0 0
    %334 = vmatpush1.bf16.msra.mxu0 %v313
    %335 = vmatprep.subr.bf16.mxu0 0
    %336 = vmatpush1.bf16.msra.mxu0 %v314
    %337 = vmatprep.subr.bf16.mxu0 0
    %338 = vmatpush1.bf16.msra.mxu0 %v315
    %339 = vmatprep.subr.bf16.mxu0 0
    %340 = vmatpush1.bf16.msra.mxu0 %v316
    %341 = vmatprep.subr.bf16.mxu0 0
    %342 = vmatpush1.bf16.msra.mxu0 0
    %343 = vmatprep.subr.bf16.mxu0 0
    %344 = vmatpush1.bf16.msra.mxu0 0
    %345 = vmatprep.subr.bf16.mxu0 0
    %346 = vmatpush1.bf16.msra.mxu0 0
    %347 = vmatprep.subr.bf16.mxu0 0
    %348 = vmatpush1.bf16.msra.mxu0 0
    %349 = vmatprep.subr.bf16.mxu0 0
    %350 = vmatpush1.bf16.msra.mxu0 0
    %351 = vmatprep.subr.bf16.mxu0 0
    %352 = vmatpush1.bf16.msra.mxu0 0
    %353 = vmatprep.subr.bf16.mxu0 0
    %354 = vmatpush1.bf16.msra.mxu0 0
    %355 = vmatprep.subr.bf16.mxu0 0
    %356 = vmatpush1.bf16.msra.mxu0 0
    %357 = vmatprep.mubr.bf16.mxu0 0
    %358 = vmatmul.mubr.bf16.gmra.mrb[0].mxu0 %v253
    %v359 = vpop.f32.mrb[0].mxu0
    %v360 = vadd.f32 %v275, %v359
    %v361 = vpop.f32.mrb[0].mxu0
    %v362 = vpop.f32.mrb[0].mxu0
    %v363 = vadd.f32 %v275, %v362
    %v364 = vpop.f32.mrb[0].mxu0
    %365 = vdwg.mxu0
    %366 = vst [vmem:[#allocation8] sm:$0xff] %v360
    %367 = vst [vmem:[#allocation8 + $0x8] sm:$0xff] %v363
    // Predicated region
    $region34: #{tpu_custom_call.1} parent=1 // pred_check
      _
    $region35: #{tpu_custom_call.1} parent=1 // pred_check_branch
      %369 = sbr.rel (0) target = $region37
    $region36: #{tpu_custom_call.1} parent=1 // pred_region
      %s371 = ssub.s32 256, 256
      %372 = vsyncadd [#allocation4], %s371
      %s373 = sshll.u32 [#allocation8], 4
      %s374 = int_to_ptr.vmem [resolvable:$true] %s373
      %379 = dma.vmem_to_hbm [thread:$0]  %s374, 256, %s5, [#allocation4], 128, 128, 8
    $region37: #{tpu_custom_call.1} parent=1 // pred_fallthru
      _
    // Predicated region
    $region38: #{tpu_custom_call.1} parent=1 // pred_check
      _
    $region39: #{tpu_custom_call.1} parent=1 // pred_check_branch
      %381 = sbr.rel (0) target = $region41
    $region40: #{tpu_custom_call.1} parent=1 // pred_region
      %382 = dma.done [#allocation4], 256
    $region41: #{tpu_custom_call.1} parent=1 // pred_fallthru
      _
    %383 = vsyncpa [#allocation3], 1
    %384 = vsyncpa [#allocation6], 1
    %385 = vsyncpa [#allocation4], 1

</llo_original>
